<compile_context>
chip_gen: v6e
topology: v6e:2x2x1
jax: 0.10.0
libtpu: 0.0.40
codegen_flags: <defaults>
</compile_context>

<pallas_src>
import jax
import jax.numpy as jnp
from jax.experimental import pallas as pl

EPS = 1e-5
NEG_SLOPE = 0.2
LANES = 128


def _round_up(n, m):
    return -(-n // m) * m


# ----------------------------- Pallas kernel --------------------------------
def _make_kernel(lf_pad):
    o_wbc = lf_pad                # WBC rows  [lf_pad, lf_pad+128)
    o_wd = lf_pad + LANES         # WD  rows  [lf_pad+128, lf_pad+256)
    o_bias = lf_pad + 2 * LANES   # bias tile [lf_pad+256, lf_pad+264)

    def kernel(x_ref, slab_ref, out_ref):
        def lrelu(v):
            # max(v, 0.2*v) == LeakyReLU(slope=0.2) for slope in (0, 1).
            return jnp.maximum(v, NEG_SLOPE * v)

        x = x_ref[...]                                   # (B_pad, lf_pad)
        wa = slab_ref[0:lf_pad, :]                       # (lf_pad, 128)
        wbc = slab_ref[o_wbc:o_wd, :]                    # (128, 128)
        wd = slab_ref[o_wd:o_bias, :]                    # (128, 128)
        bias = slab_ref[o_bias:o_bias + 8, :]            # one aligned (8,128) tile
        b_a = bias[0:1, :]
        b_bc = bias[1:2, :]
        b_d = bias[2:3, :]

        h_a = lrelu(jnp.dot(x, wa, preferred_element_type=jnp.float32) + b_a)
        h_bc = lrelu(jnp.dot(h_a, wbc, preferred_element_type=jnp.float32) + b_bc)
        logits = jnp.dot(h_bc, wd, preferred_element_type=jnp.float32) + b_d
        # Exact sigmoid (approx reciprocal previously exceeded the test tolerance).
        out_ref[...] = 1.0 / (1.0 + jnp.exp(-logits))

    return kernel


# ----------------------------- BN / weight folding ---------------------------
def _bn_scale_shift(g, be, m, v):
    s = g * jax.lax.rsqrt(v + EPS)
    return s, be - m * s


def fold_params(params, lf_pad):
    """Fold BN into weights and pack everything into one (lf_pad+264, 128) slab."""
    (g1, be1, m1, v1, w1t, b1, g2, be2, m2, v2,
     w2t, b2, g3, be3, m3, v3,
     w21t, b21,
     w22at, b22a, g4, be4, m4, v4, w22bt, b22b,
     w23t, b23,
     w3t, b3) = params

    l_first = w1t.shape[0]
    l2 = w2t.shape[0]
    classes = w3t.shape[1]
    assert 4 * l2 <= LANES and classes <= LANES and l_first <= lf_pad

    s1, sh1 = _bn_scale_shift(g1, be1, m1, v1)   # pre-conv1 BN
    s2, sh2 = _bn_scale_shift(g2, be2, m2, v2)   # BN on x1 -> fold into consumers
    s3, sh3 = _bn_scale_shift(g3, be3, m3, v3)   # BN on branch a -> fold into WD/bD
    s4, sh4 = _bn_scale_shift(g4, be4, m4, v4)   # BN on c1 -> fold into W22b

    # Stage A: x -> [h1 | h22a]
    w1f = s1[:, None] * w1t
    b1f = b1 + sh1 @ w1t
    wa = jnp.concatenate([w1f, w22at], axis=1)                       # (L_FIRST, 2*L2)
    ba = jnp.concatenate([b1f, b22a])                                # (2*L2,)

    # Stage B: [h1 | h22a] -> [lrelu(z2) | lrelu(z21) | lrelu(z23) | lrelu(z22b)]
    w2f = s2[:, None] * w2t;      b2f = b2 + sh2 @ w2t
    w21f = s2[:, None] * w21t;    b21f = b21 + sh2 @ w21t
    w23f = s2[:, None] * w23t;    b23f = b23 + sh2 @ w23t
    w22bf = s4[:, None] * w22bt;  b22bf = b22b + sh4 @ w22bt
    top = jnp.concatenate([w2f, w21f, w23f, jnp.zeros((l2, l2), jnp.float32)], axis=1)
    bot = jnp.concatenate([jnp.zeros((l2, 3 * l2), jnp.float32), w22bf], axis=1)
    wbc = jnp.concatenate([top, bot], axis=0)                        # (2*L2, 4*L2)
    bbc = jnp.concatenate([b2f, b21f, b23f, b22bf])                  # (4*L2,)

    # Stage C: branch sum + BN3 + final Linear folded into one matmul.
    wd = jnp.concatenate([s3[:, None] * w3t, w3t, w3t, w3t], axis=0)  # (4*L2, C)
    bd = b3 + sh3 @ w3t                                               # (C,)

    # One 128-lane, 8-row-aligned parameter slab. All padded lanes/rows are 0 so
    # padded activation columns stay exactly 0 through lrelu (correctness).
    rows = lf_pad + 2 * LANES + 8
    slab = jnp.zeros((rows, LANES), jnp.float32)
    slab = slab.at[0:l_first, 0:2 * l2].set(wa)
    slab = slab.at[lf_pad:lf_pad + 2 * l2, 0:4 * l2].set(wbc)
    slab = slab.at[lf_pad + LANES:lf_pad + LANES + 4 * l2, 0:classes].set(wd)
    slab = slab.at[lf_pad + 2 * LANES + 0, 0:2 * l2].set(ba)
    slab = slab.at[lf_pad + 2 * LANES + 1, 0:4 * l2].set(bbc)
    slab = slab.at[lf_pad + 2 * LANES + 2, 0:classes].set(bd)
    return slab, classes


# ----------------------------- wrapper ---------------------------------------
def build_cnn6(params):
    """Fold/pack parameters ONCE (model-load time) and return a jitted forward."""
    l_first = params[4].shape[0]              # w1t is (L_FIRST, L_SECOND)
    lf_pad = _round_up(l_first, 8)
    slab, classes = fold_params(params, lf_pad)
    slab = jax.block_until_ready(slab)        # folding cost paid once, not per call
    kernel = _make_kernel(lf_pad)
    rows = slab.shape[0]

    @jax.jit
    def forward(x_nchw):
        B, lf, H, W = x_nchw.shape
        assert lf == l_first and H == 1 and W == 1, \
            "CNN6 forward only type-checks for 1x1 spatial input"
        x2d = x_nchw.reshape(B, lf).astype(jnp.float32)
        b_pad = _round_up(B, 8)
        x2d = jnp.pad(x2d, ((0, b_pad - B), (0, lf_pad - lf)))

        flops = 2 * b_pad * (lf_pad * LANES + 2 * LANES * LANES)
        bytes_acc = 4 * (b_pad * lf_pad + rows * LANES + b_pad * LANES)

        out_pad = pl.pallas_call(
            kernel,
            out_shape=jax.ShapeDtypeStruct((b_pad, LANES), jnp.float32),
            in_specs=[pl.BlockSpec((b_pad, lf_pad), lambda: (0, 0)),
                      pl.BlockSpec((rows, LANES), lambda: (0, 0))],
            out_specs=pl.BlockSpec((b_pad, LANES), lambda: (0, 0)),
            cost_estimate=pl.CostEstimate(flops=int(flops),
                                          transcendentals=int(b_pad * LANES),
                                          bytes_accessed=int(bytes_acc)),
        )(x2d, slab)
        return out_pad[:B, :classes], x_nchw

    return forward


# ----------------------------- param init ------------------------------------
def make_params(key, l_first, l_second, classes):
    ks = jax.random.split(key, 11)

    def bn_params(k, c):
        kg, kb, km, kv = jax.random.split(k, 4)
        return (jax.random.uniform(kg, (c,), jnp.float32, 0.5, 1.5),   # gamma
                0.1 * jax.random.normal(kb, (c,), jnp.float32),        # beta
                0.1 * jax.random.normal(km, (c,), jnp.float32),        # running mean
                jax.random.uniform(kv, (c,), jnp.float32, 0.5, 1.5))   # running var

    def conv_params(k, fan_out, fan_in):
        kw, kb = jax.random.split(k)
        bound = (6.0 / (fan_in + fan_out)) ** 0.5
        w = jax.random.uniform(kw, (fan_out, fan_in), jnp.float32, -bound, bound)
        b = 0.05 * jax.random.normal(kb, (fan_out,), jnp.float32)
        return w.T, b                           # pre-transposed (in, out)

    g1, be1, m1, v1 = bn_params(ks[0], l_first)
    w1t, b1 = conv_params(ks[1], l_second, l_first)
    g2, be2, m2, v2 = bn_params(ks[2], l_second)

    w2t, b2 = conv_params(ks[3], l_second, l_second)
    g3, be3, m3, v3 = bn_params(ks[4], l_second)

    w21t, b21 = conv_params(ks[5], l_second, l_second)

    w22at, b22a = conv_params(ks[6], l_second, l_first)
    g4, be4, m4, v4 = bn_params(ks[7], l_second)
    w22bt, b22b = conv_params(ks[8], l_second, l_second)

    w23t, b23 = conv_params(ks[9], l_second, l_second)

    w3t, b3 = conv_params(ks[10], classes, l_second)

    return (g1, be1, m1, v1, w1t, b1, g2, be2, m2, v2,
            w2t, b2, g3, be3, m3, v3,
            w21t, b21,
            w22at, b22a, g4, be4, m4, v4, w22bt, b22b,
            w23t, b23,
            w3t, b3)


# ----------------------------- pure-JAX reference -----------------------------
def cnn6_reference(x_nchw, params):
    (g1, be1, m1, v1, w1t, b1, g2, be2, m2, v2,
     w2t, b2, g3, be3, m3, v3,
     w21t, b21,
     w22at, b22a, g4, be4, m4, v4, w22bt, b22b,
     w23t, b23,
     w3t, b3) = params

    def bn(t, g, be, m, v):
        return (t - m) / jnp.sqrt(v + EPS) * g + be

    def lrelu(t):
        return jnp.where(t > 0, t, NEG_SLOPE * t)

    B = x_nchw.shape[0]
    x = x_nchw.reshape(B, -1)
    x1 = bn(lrelu(bn(x, g1, be1, m1, v1) @ w1t + b1), g2, be2, m2, v2)
    br_a = bn(lrelu(x1 @ w2t + b2), g3, be3, m3, v3)
    br_b = lrelu(x1 @ w21t + b21)                                   # Dropout -> identity (eval)
    br_c = lrelu(bn(lrelu(x @ w22at + b22a), g4, be4, m4, v4) @ w22bt + b22b)
    x2 = br_a + br_b + br_c
    x5 = lrelu(x1 @ w23t + b23)
    return jax.nn.sigmoid((x2 + x5) @ w3t + b3)


# ----------------------------- main -------------------------------------------
if __name__ == "__main__":
    B, L_FIRST, L_SECOND, CLASSES = 4, 8, 16, 2

    key = jax.random.PRNGKey(0)
    kx, kp = jax.random.split(key)
    x = jax.random.normal(kx, (B, L_FIRST, 1, 1), jnp.float32)
    params = make_params(kp, L_FIRST, L_SECOND, CLASSES)

    forward = build_cnn6(params)          # folds BN + packs slab once
    out, x_passthrough = forward(x)
    out = jax.block_until_ready(out)

    ref = cnn6_reference(x, params)
    assert out.shape == (B, CLASSES)
    assert x_passthrough.shape == x.shape
    max_err = float(jnp.max(jnp.abs(out - ref)))
    assert max_err < 1e-3, (max_err, out, ref)

    print("KERNEL_OK")
</pallas_src>

<mosaic_0001>
module attributes {stable_mosaic.version = 11 : i64} {
  func.func @kernel(%arg0: memref<8x8xf32, #tpu.memory_space<vmem>>, %arg1: memref<272x128xf32, #tpu.memory_space<vmem>>, %arg2: memref<8x128xf32, #tpu.memory_space<vmem>>) attributes {dimension_semantics = [], scalar_prefetch = 0 : i64, scratch_operands = 0 : i64, tpu.core_type = #tpu.core_type<tc>} {
    %c0 = arith.constant 0 : index
    %c0_0 = arith.constant 0 : index
    %0 = vector.load %arg0[%c0, %c0_0] : memref<8x8xf32, #tpu.memory_space<vmem>>, vector<8x8xf32>
    %c0_1 = arith.constant 0 : index
    %c0_2 = arith.constant 0 : index
    %1 = vector.load %arg1[%c0_1, %c0_2] : memref<272x128xf32, #tpu.memory_space<vmem>>, vector<8x128xf32>
    %c8 = arith.constant 8 : index
    %c0_3 = arith.constant 0 : index
    %2 = vector.load %arg1[%c8, %c0_3] : memref<272x128xf32, #tpu.memory_space<vmem>>, vector<128x128xf32>
    %c136 = arith.constant 136 : index
    %c0_4 = arith.constant 0 : index
    %3 = vector.load %arg1[%c136, %c0_4] : memref<272x128xf32, #tpu.memory_space<vmem>>, vector<128x128xf32>
    %c264 = arith.constant 264 : index
    %c0_5 = arith.constant 0 : index
    %4 = vector.load %arg1[%c264, %c0_5] : memref<272x128xf32, #tpu.memory_space<vmem>>, vector<8x128xf32>
    %5 = vector.extract_strided_slice %4 {offsets = [0, 0], sizes = [1, 128], strides = [1, 1]} : vector<8x128xf32> to vector<1x128xf32>
    %6 = vector.extract_strided_slice %4 {offsets = [1, 0], sizes = [1, 128], strides = [1, 1]} : vector<8x128xf32> to vector<1x128xf32>
    %7 = vector.extract_strided_slice %4 {offsets = [2, 0], sizes = [1, 128], strides = [1, 1]} : vector<8x128xf32> to vector<1x128xf32>
    %cst = arith.constant dense<0.000000e+00> : vector<8x128xf32>
    %8 = tpu.matmul %0, %1, %cst {dimension_numbers = #tpu.dot_dimension_numbers<[1], [0], [0], [1], [0, 0, 1, 1], [], []>} : vector<8x8xf32>, vector<8x128xf32>, vector<8x128xf32> -> vector<8x128xf32>
    %9 = vector.broadcast %5 : vector<1x128xf32> to vector<8x128xf32>
    %10 = arith.addf %8, %9 : vector<8x128xf32>
    %cst_6 = arith.constant 2.000000e-01 : f32
    %11 = vector.broadcast %cst_6 : f32 to vector<8x128xf32>
    %12 = arith.mulf %11, %10 : vector<8x128xf32>
    %13 = arith.maximumf %10, %12 : vector<8x128xf32>
    %cst_7 = arith.constant dense<0.000000e+00> : vector<8x128xf32>
    %14 = tpu.matmul %13, %2, %cst_7 {dimension_numbers = #tpu.dot_dimension_numbers<[1], [0], [0], [1], [0, 0, 1, 1], [], []>} : vector<8x128xf32>, vector<128x128xf32>, vector<8x128xf32> -> vector<8x128xf32>
    %15 = vector.broadcast %6 : vector<1x128xf32> to vector<8x128xf32>
    %16 = arith.addf %14, %15 : vector<8x128xf32>
    %cst_8 = arith.constant 2.000000e-01 : f32
    %17 = vector.broadcast %cst_8 : f32 to vector<8x128xf32>
    %18 = arith.mulf %17, %16 : vector<8x128xf32>
    %19 = arith.maximumf %16, %18 : vector<8x128xf32>
    %cst_9 = arith.constant dense<0.000000e+00> : vector<8x128xf32>
    %20 = tpu.matmul %19, %3, %cst_9 {dimension_numbers = #tpu.dot_dimension_numbers<[1], [0], [0], [1], [0, 0, 1, 1], [], []>} : vector<8x128xf32>, vector<128x128xf32>, vector<8x128xf32> -> vector<8x128xf32>
    %21 = vector.broadcast %7 : vector<1x128xf32> to vector<8x128xf32>
    %22 = arith.addf %20, %21 : vector<8x128xf32>
    %cst_10 = arith.constant 0.000000e+00 : f32
    %23 = vector.broadcast %cst_10 : f32 to vector<8x128xf32>
    %24 = arith.subf %23, %22 : vector<8x128xf32>
    %25 = math.exp %24 : vector<8x128xf32>
    %cst_11 = arith.constant 1.000000e+00 : f32
    %26 = vector.broadcast %cst_11 : f32 to vector<8x128xf32>
    %27 = arith.addf %26, %25 : vector<8x128xf32>
    %cst_12 = arith.constant 1.000000e+00 : f32
    %28 = vector.broadcast %cst_12 : f32 to vector<8x128xf32>
    %29 = arith.divf %28, %27 : vector<8x128xf32>
    %c0_13 = arith.constant 0 : index
    %c0_14 = arith.constant 0 : index
    %30 = vector.load %arg2[%c0_13, %c0_14] : memref<8x128xf32, #tpu.memory_space<vmem>>, vector<8x128xf32>
    tpu.vector_store %arg2[%c0_13, %c0_14], %29 {strides = array<i32>} : memref<8x128xf32, #tpu.memory_space<vmem>>, vector<8x128xf32>,
    return
  }
}

</mosaic_0001>

<llo_original>
// kernel: forward.1
$region0: #{forward.1}
  #allocation0 [shape = 'u32[]', space=smem, size = 0x4, offset = 0x4, fixed_abs, tag = 'smem constant byte address 0x4 - core index']
  #allocation1 [shape = 'u32[144,128]{1,0:T(1,128)}', space=vmem, size = 0x12000, scoped, tag = 'internal scratch']
  %s0 = inlined_call_operand.vmem [shape: f32[8,8], index: 0, kind: input, shape index: {}]
  %s1 = inlined_call_operand.hbm [shape: f32[272,128], index: 1, kind: input, shape index: {}]
  %s2 = inlined_call_operand.vmem [shape: f32[8,128], index: 2, kind: output, shape index: {}]
  %s3 = sld [smem:[#allocation0]]
  $region22: #{forward.1} parent=0
    _
  %s5 = ssub.s32 1, %s3
  %s6 = scalar_select 0, %s5, %s3
  $region1: #{forward.1} parent=0
    #allocation2 [shape = 'u8[139264]{0}', space=vmem, size = 0x22000, scoped, tag = 'input window, operand 1, single buffered']
    #allocation3 [shape = 's32[1]{0}', space=sflag, size = 0x4, scoped, tag = 'scoped memory for forward.1']
    %7 = vsyncpa [#allocation3], 0
    // Predicated region
    $region2: #{forward.1} parent=1 // pred_check
      _
    $region3: #{forward.1} parent=1 // pred_check_branch
      %9 = sbr.rel (0) target = $region5
    $region4: #{forward.1} parent=1 // pred_region
      _
    $region5: #{forward.1} parent=1 // pred_fallthru
      _
    // Predicated region
    $region6: #{forward.1} parent=1 // pred_check
      _
    $region7: #{forward.1} parent=1 // pred_check_branch
      %11 = sbr.rel (0) target = $region9
    $region8: #{forward.1} parent=1 // pred_region
      %s13 = ssub.s32 4352, 4352
      %14 = vsyncadd [#allocation3], %s13
      %s15 = sshll.u32 [#allocation2], 4
      %s16 = int_to_ptr.vmem [resolvable:$true] %s15
      %21 = dma.hbm_to_vmem [thread:$0]  %s1, 4352, %s16, [#allocation3], 128, 128, 8
    $region9: #{forward.1} parent=1 // pred_fallthru
      _
    // Predicated region
    $region10: #{forward.1} parent=1 // pred_check
      _
    $region11: #{forward.1} parent=1 // pred_check_branch
      %23 = sbr.rel (0) target = $region13
    $region12: #{forward.1} parent=1 // pred_region
      %24 = dma.done [#allocation3], 4352
    $region13: #{forward.1} parent=1 // pred_fallthru
      _
    %v25 = vld [vmem:[%s0] sm:$0xff]
    %v26 = vld [vmem:[#allocation2] sm:$0xff]
    %v27 = vld [vmem:[#allocation2 + $0x8] sm:$0xff]
    %v28 = vld [vmem:[#allocation2 + $0x10] sm:$0xff]
    %v29 = vld [vmem:[#allocation2 + $0x18] sm:$0xff]
    %v30 = vld [vmem:[#allocation2 + $0x20] sm:$0xff]
    %v31 = vld [vmem:[#allocation2 + $0x28] sm:$0xff]
    %v32 = vld [vmem:[#allocation2 + $0x30] sm:$0xff]
    %v33 = vld [vmem:[#allocation2 + $0x38] sm:$0xff]
    %v34 = vld [vmem:[#allocation2 + $0x40] sm:$0xff]
    %v35 = vld [vmem:[#allocation2 + $0x48] sm:$0xff]
    %v36 = vld [vmem:[#allocation2 + $0x50] sm:$0xff]
    %v37 = vld [vmem:[#allocation2 + $0x58] sm:$0xff]
    %v38 = vld [vmem:[#allocation2 + $0x60] sm:$0xff]
    %v39 = vld [vmem:[#allocation2 + $0x68] sm:$0xff]
    %v40 = vld [vmem:[#allocation2 + $0x70] sm:$0xff]
    %v41 = vld [vmem:[#allocation2 + $0x78] sm:$0xff]
    %v42 = vld [vmem:[#allocation2 + $0x80] sm:$0xff]
    %v43 = vld [vmem:[#allocation2 + $0x88] sm:$0xff]
    %v44 = vld [vmem:[#allocation2 + $0x90] sm:$0xff]
    %v45 = vld [vmem:[#allocation2 + $0x98] sm:$0xff]
    %v46 = vld [vmem:[#allocation2 + $0xa0] sm:$0xff]
    %v47 = vld [vmem:[#allocation2 + $0xa8] sm:$0xff]
    %v48 = vld [vmem:[#allocation2 + $0xb0] sm:$0xff]
    %v49 = vld [vmem:[#allocation2 + $0xb8] sm:$0xff]
    %v50 = vld [vmem:[#allocation2 + $0xc0] sm:$0xff]
    %v51 = vld [vmem:[#allocation2 + $0xc8] sm:$0xff]
    %v52 = vld [vmem:[#allocation2 + $0xd0] sm:$0xff]
    %v53 = vld [vmem:[#allocation2 + $0xd8] sm:$0xff]
    %v54 = vld [vmem:[#allocation2 + $0xe0] sm:$0xff]
    %v55 = vld [vmem:[#allocation2 + $0xe8] sm:$0xff]
    %v56 = vld [vmem:[#allocation2 + $0xf0] sm:$0xff]
    %v57 = vld [vmem:[#allocation2 + $0xf8] sm:$0xff]
    %v58 = vld [vmem:[#allocation2 + $0x100] sm:$0xff]
    %v59 = vld [vmem:[#allocation2 + $0x108] sm:$0xff]
    %v60 = vlaneseq
    %v61 = vshrl.u32 %v60, 7
    %v62 = vsub.s32 0, %v61
    %v63 = vrot.slane %v59, %v62
    %vm64 = vcmask 64512
    %v66 = vsel %vm64, %v25, 0
    %68 = vmatprep.subr.mxu0 0.0
    %69 = vmatpush1.msra.mxu0 0.0
    %70 = vmatprep.subr.mxu0 0.0
    %71 = vmatpush1.msra.mxu0 0.0
    %72 = vmatprep.subr.mxu0 0.0
    %73 = vmatpush1.msra.mxu0 0.0
    %74 = vmatprep.subr.mxu0 0.0
    %75 = vmatpush1.msra.mxu0 0.0
    %76 = vmatprep.subr.mxu0 0.0
    %77 = vmatpush1.msra.mxu0 0.0
    %78 = vmatprep.subr.mxu0 0.0
    %79 = vmatpush1.msra.mxu0 0.0
    %80 = vmatprep.subr.mxu0 0.0
    %81 = vmatpush1.msra.mxu0 0.0
    %82 = vmatprep.subr.mxu0 0.0
    %83 = vmatpush1.msra.mxu0 0.0
    %84 = vmatprep.subr.mxu0 0.0
    %85 = vmatpush1.msra.mxu0 0.0
    %86 = vmatprep.subr.mxu0 0.0
    %87 = vmatpush1.msra.mxu0 0.0
    %88 = vmatprep.subr.mxu0 0.0
    %89 = vmatpush1.msra.mxu0 0.0
    %90 = vmatprep.subr.mxu0 0.0
    %91 = vmatpush1.msra.mxu0 0.0
    %92 = vmatprep.subr.mxu0 0.0
    %93 = vmatpush1.msra.mxu0 0.0
    %94 = vmatprep.subr.mxu0 0.0
    %95 = vmatpush1.msra.mxu0 0.0
    %96 = vmatprep.subr.mxu0 0.0
    %97 = vmatpush1.msra.mxu0 0.0
    %98 = vmatprep.subr.mxu0 0.0
    %99 = vmatpush1.msra.mxu0 %v26
    %100 = vmatprep.subr.mxu0 0.0
    %101 = vmatpush2.msra.mxu0 0.0
    %102 = vmatprep.subr.mxu0 0.0
    %103 = vmatpush2.msra.mxu0 0.0
    %104 = vmatprep.subr.mxu0 0.0
    %105 = vmatpush2.msra.mxu0 0.0
    %106 = vmatprep.subr.mxu0 0.0
    %107 = vmatpush2.msra.mxu0 0.0
    %108 = vmatprep.subr.mxu0 0.0
    %109 = vmatpush2.msra.mxu0 0.0
    %110 = vmatprep.subr.mxu0 0.0
    %111 = vmatpush2.msra.mxu0 0.0
    %112 = vmatprep.subr.mxu0 0.0
    %113 = vmatpush2.msra.mxu0 0.0
    %114 = vmatprep.subr.mxu0 0.0
    %115 = vmatpush2.msra.mxu0 0.0
    %116 = vmatprep.subr.mxu0 0.0
    %117 = vmatpush2.msra.mxu0 0.0
    %118 = vmatprep.subr.mxu0 0.0
    %119 = vmatpush2.msra.mxu0 0.0
    %120 = vmatprep.subr.mxu0 0.0
    %121 = vmatpush2.msra.mxu0 0.0
    %122 = vmatprep.subr.mxu0 0.0
    %123 = vmatpush2.msra.mxu0 0.0
    %124 = vmatprep.subr.mxu0 0.0
    %125 = vmatpush2.msra.mxu0 0.0
    %126 = vmatprep.subr.mxu0 0.0
    %127 = vmatpush2.msra.mxu0 0.0
    %128 = vmatprep.subr.mxu0 0.0
    %129 = vmatpush2.msra.mxu0 0.0
    %130 = vmatprep.subr.mxu0 0.0
    %131 = vmatpush2.msra.mxu0 0.0
    %132 = vmatprep.mubr.f32.mxu0 0.0
    %133 = vmatmul.mubr.f32.gmra.mxu0 %v66
    %v134 = vpop.f32.mrf.mxu0
    %v135 = vadd.f32 %v63, %v134
    %v136 = vpop.f32.mrf.mxu0
    %137 = vdwg.mxu0
    %v138 = vmul.f32 %v135, 0.2
    %v139 = vmax.f32 %v135, %v138
    %v140 = vlaneseq
    %v141 = vshrl.u32 %v140, 7
    %v142 = vsub.s32 1, %v141
    %v143 = vrot.slane %v59, %v142
    %144 = vmatprep.subr.mxu0 0.0
    %145 = vmatpush1.msra.mxu0 %v42
    %146 = vmatprep.subr.mxu0 0.0
    %147 = vmatpush1.msra.mxu0 %v41
    %148 = vmatprep.subr.mxu0 0.0
    %149 = vmatpush1.msra.mxu0 %v40
    %150 = vmatprep.subr.mxu0 0.0
    %151 = vmatpush1.msra.mxu0 %v39
    %152 = vmatprep.subr.mxu0 0.0
    %153 = vmatpush1.msra.mxu0 %v38
    %154 = vmatprep.subr.mxu0 0.0
    %155 = vmatpush1.msra.mxu0 %v37
    %156 = vmatprep.subr.mxu0 0.0
    %157 = vmatpush1.msra.mxu0 %v36
    %158 = vmatprep.subr.mxu0 0.0
    %159 = vmatpush1.msra.mxu0 %v35
    %160 = vmatprep.subr.mxu0 0.0
    %161 = vmatpush1.msra.mxu0 %v34
    %162 = vmatprep.subr.mxu0 0.0
    %163 = vmatpush1.msra.mxu0 %v33
    %164 = vmatprep.subr.mxu0 0.0
    %165 = vmatpush1.msra.mxu0 %v32
    %166 = vmatprep.subr.mxu0 0.0
    %167 = vmatpush1.msra.mxu0 %v31
    %168 = vmatprep.subr.mxu0 0.0
    %169 = vmatpush1.msra.mxu0 %v30
    %170 = vmatprep.subr.mxu0 0.0
    %171 = vmatpush1.msra.mxu0 %v29
    %172 = vmatprep.subr.mxu0 0.0
    %173 = vmatpush1.msra.mxu0 %v28
    %174 = vmatprep.subr.mxu0 0.0
    %175 = vmatpush1.msra.mxu0 %v27
    %176 = vmatprep.subr.mxu0 0.0
    %177 = vmatpush2.msra.mxu0 0.0
    %178 = vmatprep.subr.mxu0 0.0
    %179 = vmatpush2.msra.mxu0 0.0
    %180 = vmatprep.subr.mxu0 0.0
    %181 = vmatpush2.msra.mxu0 0.0
    %182 = vmatprep.subr.mxu0 0.0
    %183 = vmatpush2.msra.mxu0 0.0
    %184 = vmatprep.subr.mxu0 0.0
    %185 = vmatpush2.msra.mxu0 0.0
    %186 = vmatprep.subr.mxu0 0.0
    %187 = vmatpush2.msra.mxu0 0.0
    %188 = vmatprep.subr.mxu0 0.0
    %189 = vmatpush2.msra.mxu0 0.0
    %190 = vmatprep.subr.mxu0 0.0
    %191 = vmatpush2.msra.mxu0 0.0
    %192 = vmatprep.subr.mxu0 0.0
    %193 = vmatpush2.msra.mxu0 0.0
    %194 = vmatprep.subr.mxu0 0.0
    %195 = vmatpush2.msra.mxu0 0.0
    %196 = vmatprep.subr.mxu0 0.0
    %197 = vmatpush2.msra.mxu0 0.0
    %198 = vmatprep.subr.mxu0 0.0
    %199 = vmatpush2.msra.mxu0 0.0
    %200 = vmatprep.subr.mxu0 0.0
    %201 = vmatpush2.msra.mxu0 0.0
    %202 = vmatprep.subr.mxu0 0.0
    %203 = vmatpush2.msra.mxu0 0.0
    %204 = vmatprep.subr.mxu0 0.0
    %205 = vmatpush2.msra.mxu0 0.0
    %206 = vmatprep.subr.mxu0 0.0
    %207 = vmatpush2.msra.mxu0 0.0
    %208 = vmatprep.mubr.f32.mxu0 0.0
    %209 = vmatmul.mubr.f32.gmra.mxu0 %v139
    %v210 = vpop.f32.mrf.mxu0
    %v211 = vadd.f32 %v143, %v210
    %v212 = vpop.f32.mrf.mxu0
    %213 = vdwg.mxu0
    %v214 = vmul.f32 %v211, 0.2
    %v215 = vmax.f32 %v211, %v214
    %v216 = vlaneseq
    %v217 = vshrl.u32 %v216, 7
    %v218 = vsub.s32 2, %v217
    %v219 = vrot.slane %v59, %v218
    %220 = vmatprep.subr.mxu0 0.0
    %221 = vmatpush1.msra.mxu0 %v58
    %222 = vmatprep.subr.mxu0 0.0
    %223 = vmatpush1.msra.mxu0 %v57
    %224 = vmatprep.subr.mxu0 0.0
    %225 = vmatpush1.msra.mxu0 %v56
    %226 = vmatprep.subr.mxu0 0.0
    %227 = vmatpush1.msra.mxu0 %v55
    %228 = vmatprep.subr.mxu0 0.0
    %229 = vmatpush1.msra.mxu0 %v54
    %230 = vmatprep.subr.mxu0 0.0
    %231 = vmatpush1.msra.mxu0 %v53
    %232 = vmatprep.subr.mxu0 0.0
    %233 = vmatpush1.msra.mxu0 %v52
    %234 = vmatprep.subr.mxu0 0.0
    %235 = vmatpush1.msra.mxu0 %v51
    %236 = vmatprep.subr.mxu0 0.0
    %237 = vmatpush1.msra.mxu0 %v50
    %238 = vmatprep.subr.mxu0 0.0
    %239 = vmatpush1.msra.mxu0 %v49
    %240 = vmatprep.subr.mxu0 0.0
    %241 = vmatpush1.msra.mxu0 %v48
    %242 = vmatprep.subr.mxu0 0.0
    %243 = vmatpush1.msra.mxu0 %v47
    %244 = vmatprep.subr.mxu0 0.0
    %245 = vmatpush1.msra.mxu0 %v46
    %246 = vmatprep.subr.mxu0 0.0
    %247 = vmatpush1.msra.mxu0 %v45
    %248 = vmatprep.subr.mxu0 0.0
    %249 = vmatpush1.msra.mxu0 %v44
    %250 = vmatprep.subr.mxu0 0.0
    %251 = vmatpush1.msra.mxu0 %v43
    %252 = vmatprep.subr.mxu0 0.0
    %253 = vmatpush2.msra.mxu0 0.0
    %254 = vmatprep.subr.mxu0 0.0
    %255 = vmatpush2.msra.mxu0 0.0
    %256 = vmatprep.subr.mxu0 0.0
    %257 = vmatpush2.msra.mxu0 0.0
    %258 = vmatprep.subr.mxu0 0.0
    %259 = vmatpush2.msra.mxu0 0.0
    %260 = vmatprep.subr.mxu0 0.0
    %261 = vmatpush2.msra.mxu0 0.0
    %262 = vmatprep.subr.mxu0 0.0
    %263 = vmatpush2.msra.mxu0 0.0
    %264 = vmatprep.subr.mxu0 0.0
    %265 = vmatpush2.msra.mxu0 0.0
    %266 = vmatprep.subr.mxu0 0.0
    %267 = vmatpush2.msra.mxu0 0.0
    %268 = vmatprep.subr.mxu0 0.0
    %269 = vmatpush2.msra.mxu0 0.0
    %270 = vmatprep.subr.mxu0 0.0
    %271 = vmatpush2.msra.mxu0 0.0
    %272 = vmatprep.subr.mxu0 0.0
    %273 = vmatpush2.msra.mxu0 0.0
    %274 = vmatprep.subr.mxu0 0.0
    %275 = vmatpush2.msra.mxu0 0.0
    %276 = vmatprep.subr.mxu0 0.0
    %277 = vmatpush2.msra.mxu0 0.0
    %278 = vmatprep.subr.mxu0 0.0
    %279 = vmatpush2.msra.mxu0 0.0
    %280 = vmatprep.subr.mxu0 0.0
    %281 = vmatpush2.msra.mxu0 0.0
    %282 = vmatprep.subr.mxu0 0.0
    %283 = vmatpush2.msra.mxu0 0.0
    %284 = vmatprep.mubr.f32.mxu0 0.0
    %285 = vmatmul.mubr.f32.gmra.mxu0 %v215
    %v286 = vpop.f32.mrf.mxu0
    %v287 = vadd.f32 %v219, %v286
    %v288 = vpop.f32.mrf.mxu0
    %289 = vdwg.mxu0
    %v290 = vsub.f32 0.0, %v287
    %v291 = vmul.f32 %v290, 1.442695
    %v292 = vpow.pop %v291
    %v293 = vadd.f32 %v292, 1.0
    %v294 = vrcp.pop %v293
    %v295 = vmul.f32 1.0, %v294
    %296 = vst [vmem:[%s2] sm:$0xff] %v295
    // Predicated region
    $region14: #{forward.1} parent=1 // pred_check
      _
    $region15: #{forward.1} parent=1 // pred_check_branch
      %298 = sbr.rel (0) target = $region17
    $region16: #{forward.1} parent=1 // pred_region
      _
    $region17: #{forward.1} parent=1 // pred_fallthru
      _
    // Predicated region
    $region18: #{forward.1} parent=1 // pred_check
      _
    $region19: #{forward.1} parent=1 // pred_check_branch
      %300 = sbr.rel (0) target = $region21
    $region20: #{forward.1} parent=1 // pred_region
      _
    $region21: #{forward.1} parent=1 // pred_fallthru
      _
    %301 = vsyncpa [#allocation3], 1

</llo_original>
